<compile_context>
chip_gen: v7x
topology: tpu7x:2x2x1
jax: 0.10.0
libtpu: 0.0.40
codegen_flags: <defaults>
</compile_context>

<pallas_src>
import functools

import jax
import jax.numpy as jnp
from jax import lax
from jax.experimental import pallas as pl
from jax.experimental.pallas import tpu as pltpu

KSIZE = 4
BN_EPS = 0.8  # nn.BatchNorm2d(out_size, 0.8): 2nd positional arg is eps
# TODO(synk): in the original PyTorch, 0.8 was almost certainly intended as
# momentum; we reproduce the literal module (eps=0.8, training-mode batch stats).

# kh/kw taps used by output parity a (resp. b) for window offsets (0, 1) into the
# 1-padded input:  out[2i+a] = xpad[i+a+0]*W[KMAP[a][0]] + xpad[i+a+1]*W[KMAP[a][1]]
_KMAP = ((3, 1), (2, 0))
_PHASES = ((0, 0), (0, 1), (1, 0), (1, 1))


def _unet_up_conv_kernel(x_ref, w_ref, y_ref, stats_ref, *, th, tw, ic):
    """One row-tile: 4 parity-phase matmuls + per-tile BN partial stats."""
    m = th * tw
    x = x_ref[0]                                  # (th+2, tw+2, ic), bf16

    # ---- transposed conv: 4 parity phases, 2x2 taps folded into K = 4*ic ----
    ys = []
    for ab, (a, b) in enumerate(_PHASES):
        patch = jnp.concatenate(
            [x[a + 0:a + 0 + th, b + 0:b + 0 + tw, :],
             x[a + 0:a + 0 + th, b + 1:b + 1 + tw, :],
             x[a + 1:a + 1 + th, b + 0:b + 0 + tw, :],
             x[a + 1:a + 1 + th, b + 1:b + 1 + tw, :]],
            axis=-1).reshape(m, 4 * ic)                            # (m, 4*ic)
        ys.append(jnp.dot(patch, w_ref[ab],
                          preferred_element_type=jnp.float32))     # (m, oc) f32
    y4 = jnp.concatenate(ys, axis=-1)                              # (m, 4*oc) f32

    y_ref[0] = y4
    # per-tile partial BatchNorm stats (sum / sumsq per phase-channel)
    stats_ref[0] = jnp.concatenate(
        [jnp.sum(y4, axis=0, keepdims=True),
         jnp.sum(y4 * y4, axis=0, keepdims=True)], axis=0)         # (2, 4*oc)


def _pick_tile_h(h):
    for c in (64, 32, 16, 8):
        if h % c == 0 and c < h:
            return c
    return h


def unet_up(x_nhwc, wt, gamma, beta, skip_nhwc, *, tile_h=None,
            compute_dtype=jnp.bfloat16):
    """x_nhwc: (N,H,W,IC); wt: PyTorch ConvTranspose2d weight (IC,OC,4,4);
    skip_nhwc: (N,2H,2W,SC).  Returns (N,2H,2W,OC+SC) NHWC (last axis == torch dim 1)."""
    n, h, w, ic = x_nhwc.shape
    oc = wt.shape[1]
    oh, ow = 2 * h, 2 * w

    th = tile_h or _pick_tile_h(h)
    if h % th:
        th = h
    nh = h // th
    tiles = n * nh
    m = th * w

    # Halo-ed row tiles of the 1-padded input (2 duplicated rows per tile) so the
    # BlockSpec is halo-free and the auto-pipeline can double-buffer the DMA.
    xp = jnp.pad(x_nhwc, ((0, 0), (1, 1), (1, 1), (0, 0)))
    x_tiles = jnp.stack([xp[:, s:s + th + 2] for s in range(0, h, th)], axis=1)
    x_tiles = x_tiles.reshape(tiles, th + 2, w + 2, ic).astype(compute_dtype)

    # Per-phase weights with the 2x2 taps folded into K:  shape (4, 4*IC, OC).
    w_k = jnp.transpose(wt, (2, 3, 0, 1))                      # (kh, kw, IC, OC)
    w_pack = jnp.stack(
        [jnp.concatenate([w_k[_KMAP[a][di], _KMAP[b][dj]]
                          for di in range(2) for dj in range(2)], axis=0)
         for a, b in _PHASES], axis=0).astype(compute_dtype)

    kernel = functools.partial(_unet_up_conv_kernel, th=th, tw=w, ic=ic)

    y4, stats = pl.pallas_call(
        kernel,
        out_shape=(jax.ShapeDtypeStruct((tiles, m, 4 * oc), jnp.float32),
                   jax.ShapeDtypeStruct((tiles, 2, 4 * oc), jnp.float32)),
        grid=(tiles,),
        in_specs=[
            pl.BlockSpec((1, th + 2, w + 2, ic), lambda t: (t, 0, 0, 0)),
            pl.BlockSpec((4, 4 * ic, oc), lambda t: (0, 0, 0)),   # resident weights
        ],
        out_specs=[
            pl.BlockSpec((1, m, 4 * oc), lambda t: (t, 0, 0)),
            pl.BlockSpec((1, 2, 4 * oc), lambda t: (t, 0, 0)),
        ],
        compiler_params=pltpu.CompilerParams(
            dimension_semantics=("parallel",)),      # tiles are independent
    )(x_tiles, w_pack)

    # ---- global BatchNorm stats (training-mode batch stats) from partials ----
    count = float(n * oh * ow)
    s1 = stats[:, 0, :].sum(axis=0).reshape(4, oc).sum(axis=0)       # (oc,)
    s2 = stats[:, 1, :].sum(axis=0).reshape(4, oc).sum(axis=0)
    mean = s1 / count
    var = s2 / count - mean * mean                                    # biased var
    scale = gamma.astype(jnp.float32) * lax.rsqrt(var + BN_EPS)
    shift = beta.astype(jnp.float32) - mean * scale

    # ---- normalize + ReLU; XLA fuses this into the parity de-interleave ----
    y4 = jnp.maximum(y4 * jnp.tile(scale, 4) + jnp.tile(shift, 4), 0.0)
    y = y4.reshape(n, nh, th, w, 2, 2, oc).transpose(0, 1, 2, 4, 3, 5, 6)
    y = y.reshape(n, oh, ow, oc)

    # Skip concat stays out of the compute core (plain XLA copy).
    return jnp.concatenate([y, skip_nhwc.astype(y.dtype)], axis=-1)


def unet_up_ref(x_nhwc, wt, gamma, beta, skip_nhwc, compute_dtype=jnp.bfloat16):
    """Pure-JAX reference (XLA conv, same bf16-operand / f32-accum precision)."""
    w_hwio = jnp.transpose(wt[:, :, ::-1, ::-1], (2, 3, 0, 1))
    conv = lax.conv_general_dilated(
        x_nhwc.astype(compute_dtype), w_hwio.astype(compute_dtype),
        window_strides=(1, 1), padding=((2, 2), (2, 2)), lhs_dilation=(2, 2),
        dimension_numbers=("NHWC", "HWIO", "NHWC"),
        preferred_element_type=jnp.float32)
    mean = conv.mean(axis=(0, 1, 2), keepdims=True)
    var = ((conv - mean) ** 2).mean(axis=(0, 1, 2), keepdims=True)
    y = (conv - mean) * lax.rsqrt(var + BN_EPS) * gamma + beta
    y = jnp.maximum(y, 0.0)
    return jnp.concatenate([y, skip_nhwc], axis=-1)


if __name__ == "__main__":
    key = jax.random.PRNGKey(0)
    kx, ks, kw_, kg, kb = jax.random.split(key, 5)

    N, IC, OC, H, W = 2, 4, 4, 16, 16        # x: NCHW (2,4,16,16) in PyTorch terms
    SC = OC                                  # skip: NCHW (2,4,32,32)

    x = jax.random.normal(kx, (N, H, W, IC), jnp.float32)              # NHWC
    skip = jax.random.normal(ks, (N, 2 * H, 2 * W, SC), jnp.float32)   # NHWC
    wt = 0.1 * jax.random.normal(kw_, (IC, OC, KSIZE, KSIZE), jnp.float32)
    gamma = 1.0 + 0.1 * jax.random.normal(kg, (OC,), jnp.float32)
    beta = 0.1 * jax.random.normal(kb, (OC,), jnp.float32)

    unet_up_jit = jax.jit(unet_up)           # lets XLA fuse the BN/ReLU epilogue
    out = jax.block_until_ready(unet_up_jit(x, wt, gamma, beta, skip))
    ref = unet_up_ref(x, wt, gamma, beta, skip)

    assert out.shape == (N, 2 * H, 2 * W, OC + SC), out.shape
    err = float(jnp.abs(out - ref).max())
    assert jnp.allclose(out, ref, atol=1e-3, rtol=1e-3), err
    print("KERNEL_OK")
</pallas_src>

<mosaic_0001>
module attributes {stable_mosaic.version = 11 : i64} {
  func.func @_unet_up_conv_kernel(%arg0: i32, %arg1: memref<1x10x18x4xbf16, #tpu.memory_space<vmem>>, %arg2: memref<4x16x4xbf16, #tpu.memory_space<vmem>>, %arg3: memref<1x128x16xf32, #tpu.memory_space<vmem>>, %arg4: memref<1x2x16xf32, #tpu.memory_space<vmem>>) attributes {dimension_semantics = [#tpu.dimension_semantics<parallel>], iteration_bounds = array<i64: 4>, scalar_prefetch = 0 : i64, scratch_operands = 0 : i64, tpu.core_type = #tpu.core_type<tc>, window_params = [{transform_indices = @transform_0, window_bounds = array<i64: 1, 10, 18, 4>}, {pipeline_mode = #tpu.pipeline_mode<synchronous>, transform_indices = @transform_1, window_bounds = array<i64: 4, 16, 4>}, {transform_indices = @transform_2, window_bounds = array<i64: 1, 128, 16>}, {transform_indices = @transform_3, window_bounds = array<i64: 1, 2, 16>}]} {
    %c0 = arith.constant 0 : index
    %c0_0 = arith.constant 0 : index
    %c0_1 = arith.constant 0 : index
    %c0_2 = arith.constant 0 : index
    %0 = vector.load %arg1[%c0, %c0_0, %c0_1, %c0_2] : memref<1x10x18x4xbf16, #tpu.memory_space<vmem>>, vector<1x10x18x4xbf16>
    %1 = vector.shape_cast %0 : vector<1x10x18x4xbf16> to vector<10x18x4xbf16>
    %2 = vector.extract_strided_slice %1 {offsets = [0, 0, 0], sizes = [8, 16, 4], strides = [1, 1, 1]} : vector<10x18x4xbf16> to vector<8x16x4xbf16>
    %3 = vector.extract_strided_slice %1 {offsets = [0, 1, 0], sizes = [8, 16, 4], strides = [1, 1, 1]} : vector<10x18x4xbf16> to vector<8x16x4xbf16>
    %4 = vector.extract_strided_slice %1 {offsets = [1, 0, 0], sizes = [8, 16, 4], strides = [1, 1, 1]} : vector<10x18x4xbf16> to vector<8x16x4xbf16>
    %5 = vector.extract_strided_slice %1 {offsets = [1, 1, 0], sizes = [8, 16, 4], strides = [1, 1, 1]} : vector<10x18x4xbf16> to vector<8x16x4xbf16>
    %6 = tpu.concatenate %2, %3, %4, %5 in 2 : vector<8x16x4xbf16>, vector<8x16x4xbf16>, vector<8x16x4xbf16>, vector<8x16x4xbf16> -> vector<8x16x16xbf16>
    %7 = vector.shape_cast %6 : vector<8x16x16xbf16> to vector<128x16xbf16>
    %c0_3 = arith.constant 0 : index
    %c0_4 = arith.constant 0 : index
    %c0_5 = arith.constant 0 : index
    %8 = vector.load %arg2[%c0_3, %c0_4, %c0_5] : memref<4x16x4xbf16, #tpu.memory_space<vmem>>, vector<1x16x4xbf16>
    %9 = vector.shape_cast %8 : vector<1x16x4xbf16> to vector<16x4xbf16>
    %cst = arith.constant dense<0.000000e+00> : vector<128x4xf32>
    %10 = tpu.matmul %7, %9, %cst {dimension_numbers = #tpu.dot_dimension_numbers<[1], [0], [0], [1], [0, 0, 1, 1], [], []>} : vector<128x16xbf16>, vector<16x4xbf16>, vector<128x4xf32> -> vector<128x4xf32>
    %11 = vector.extract_strided_slice %1 {offsets = [0, 1, 0], sizes = [8, 16, 4], strides = [1, 1, 1]} : vector<10x18x4xbf16> to vector<8x16x4xbf16>
    %12 = vector.extract_strided_slice %1 {offsets = [0, 2, 0], sizes = [8, 16, 4], strides = [1, 1, 1]} : vector<10x18x4xbf16> to vector<8x16x4xbf16>
    %13 = vector.extract_strided_slice %1 {offsets = [1, 1, 0], sizes = [8, 16, 4], strides = [1, 1, 1]} : vector<10x18x4xbf16> to vector<8x16x4xbf16>
    %14 = vector.extract_strided_slice %1 {offsets = [1, 2, 0], sizes = [8, 16, 4], strides = [1, 1, 1]} : vector<10x18x4xbf16> to vector<8x16x4xbf16>
    %15 = tpu.concatenate %11, %12, %13, %14 in 2 : vector<8x16x4xbf16>, vector<8x16x4xbf16>, vector<8x16x4xbf16>, vector<8x16x4xbf16> -> vector<8x16x16xbf16>
    %16 = vector.shape_cast %15 : vector<8x16x16xbf16> to vector<128x16xbf16>
    %c1 = arith.constant 1 : index
    %c0_6 = arith.constant 0 : index
    %c0_7 = arith.constant 0 : index
    %17 = vector.load %arg2[%c1, %c0_6, %c0_7] : memref<4x16x4xbf16, #tpu.memory_space<vmem>>, vector<1x16x4xbf16>
    %18 = vector.shape_cast %17 : vector<1x16x4xbf16> to vector<16x4xbf16>
    %cst_8 = arith.constant dense<0.000000e+00> : vector<128x4xf32>
    %19 = tpu.matmul %16, %18, %cst_8 {dimension_numbers = #tpu.dot_dimension_numbers<[1], [0], [0], [1], [0, 0, 1, 1], [], []>} : vector<128x16xbf16>, vector<16x4xbf16>, vector<128x4xf32> -> vector<128x4xf32>
    %20 = vector.extract_strided_slice %1 {offsets = [1, 0, 0], sizes = [8, 16, 4], strides = [1, 1, 1]} : vector<10x18x4xbf16> to vector<8x16x4xbf16>
    %21 = vector.extract_strided_slice %1 {offsets = [1, 1, 0], sizes = [8, 16, 4], strides = [1, 1, 1]} : vector<10x18x4xbf16> to vector<8x16x4xbf16>
    %22 = vector.extract_strided_slice %1 {offsets = [2, 0, 0], sizes = [8, 16, 4], strides = [1, 1, 1]} : vector<10x18x4xbf16> to vector<8x16x4xbf16>
    %23 = vector.extract_strided_slice %1 {offsets = [2, 1, 0], sizes = [8, 16, 4], strides = [1, 1, 1]} : vector<10x18x4xbf16> to vector<8x16x4xbf16>
    %24 = tpu.concatenate %20, %21, %22, %23 in 2 : vector<8x16x4xbf16>, vector<8x16x4xbf16>, vector<8x16x4xbf16>, vector<8x16x4xbf16> -> vector<8x16x16xbf16>
    %25 = vector.shape_cast %24 : vector<8x16x16xbf16> to vector<128x16xbf16>
    %c2 = arith.constant 2 : index
    %c0_9 = arith.constant 0 : index
    %c0_10 = arith.constant 0 : index
    %26 = vector.load %arg2[%c2, %c0_9, %c0_10] : memref<4x16x4xbf16, #tpu.memory_space<vmem>>, vector<1x16x4xbf16>
    %27 = vector.shape_cast %26 : vector<1x16x4xbf16> to vector<16x4xbf16>
    %cst_11 = arith.constant dense<0.000000e+00> : vector<128x4xf32>
    %28 = tpu.matmul %25, %27, %cst_11 {dimension_numbers = #tpu.dot_dimension_numbers<[1], [0], [0], [1], [0, 0, 1, 1], [], []>} : vector<128x16xbf16>, vector<16x4xbf16>, vector<128x4xf32> -> vector<128x4xf32>
    %29 = vector.extract_strided_slice %1 {offsets = [1, 1, 0], sizes = [8, 16, 4], strides = [1, 1, 1]} : vector<10x18x4xbf16> to vector<8x16x4xbf16>
    %30 = vector.extract_strided_slice %1 {offsets = [1, 2, 0], sizes = [8, 16, 4], strides = [1, 1, 1]} : vector<10x18x4xbf16> to vector<8x16x4xbf16>
    %31 = vector.extract_strided_slice %1 {offsets = [2, 1, 0], sizes = [8, 16, 4], strides = [1, 1, 1]} : vector<10x18x4xbf16> to vector<8x16x4xbf16>
    %32 = vector.extract_strided_slice %1 {offsets = [2, 2, 0], sizes = [8, 16, 4], strides = [1, 1, 1]} : vector<10x18x4xbf16> to vector<8x16x4xbf16>
    %33 = tpu.concatenate %29, %30, %31, %32 in 2 : vector<8x16x4xbf16>, vector<8x16x4xbf16>, vector<8x16x4xbf16>, vector<8x16x4xbf16> -> vector<8x16x16xbf16>
    %34 = vector.shape_cast %33 : vector<8x16x16xbf16> to vector<128x16xbf16>
    %c3 = arith.constant 3 : index
    %c0_12 = arith.constant 0 : index
    %c0_13 = arith.constant 0 : index
    %35 = vector.load %arg2[%c3, %c0_12, %c0_13] : memref<4x16x4xbf16, #tpu.memory_space<vmem>>, vector<1x16x4xbf16>
    %36 = vector.shape_cast %35 : vector<1x16x4xbf16> to vector<16x4xbf16>
    %cst_14 = arith.constant dense<0.000000e+00> : vector<128x4xf32>
    %37 = tpu.matmul %34, %36, %cst_14 {dimension_numbers = #tpu.dot_dimension_numbers<[1], [0], [0], [1], [0, 0, 1, 1], [], []>} : vector<128x16xbf16>, vector<16x4xbf16>, vector<128x4xf32> -> vector<128x4xf32>
    %38 = tpu.concatenate %10, %19, %28, %37 in 1 : vector<128x4xf32>, vector<128x4xf32>, vector<128x4xf32>, vector<128x4xf32> -> vector<128x16xf32>
    %c0_15 = arith.constant 0 : index
    %c0_16 = arith.constant 0 : index
    %c0_17 = arith.constant 0 : index
    %39 = vector.load %arg3[%c0_15, %c0_16, %c0_17] : memref<1x128x16xf32, #tpu.memory_space<vmem>>, vector<1x128x16xf32>
    %40 = vector.shape_cast %39 : vector<1x128x16xf32> to vector<128x16xf32>
    %41 = vector.shape_cast %38 : vector<128x16xf32> to vector<1x128x16xf32>
    tpu.vector_store %arg3[%c0_15, %c0_16, %c0_17], %41 {strides = array<i32>} : memref<1x128x16xf32, #tpu.memory_space<vmem>>, vector<1x128x16xf32>,
    %cst_18 = arith.constant dense<0.000000e+00> : vector<16xf32>
    %42 = vector.multi_reduction <add>, %38, %cst_18 [0] : vector<128x16xf32> to vector<16xf32>
    %43 = vector.shape_cast %42 : vector<16xf32> to vector<1x16xf32>
    %44 = arith.mulf %38, %38 : vector<128x16xf32>
    %cst_19 = arith.constant dense<0.000000e+00> : vector<16xf32>
    %45 = vector.multi_reduction <add>, %44, %cst_19 [0] : vector<128x16xf32> to vector<16xf32>
    %46 = vector.shape_cast %45 : vector<16xf32> to vector<1x16xf32>
    %47 = tpu.concatenate %43, %46 in 0 : vector<1x16xf32>, vector<1x16xf32> -> vector<2x16xf32>
    %c0_20 = arith.constant 0 : index
    %c0_21 = arith.constant 0 : index
    %c0_22 = arith.constant 0 : index
    %48 = vector.load %arg4[%c0_20, %c0_21, %c0_22] : memref<1x2x16xf32, #tpu.memory_space<vmem>>, vector<1x2x16xf32>
    %49 = vector.shape_cast %48 : vector<1x2x16xf32> to vector<2x16xf32>
    %50 = vector.shape_cast %47 : vector<2x16xf32> to vector<1x2x16xf32>
    tpu.vector_store %arg4[%c0_20, %c0_21, %c0_22], %50 {strides = array<i32>} : memref<1x2x16xf32, #tpu.memory_space<vmem>>, vector<1x2x16xf32>,
    return
  }
  func.func @transform_0(%arg0: i32) -> (i32, i32, i32, i32) {
    %c0_i32 = arith.constant 0 : i32
    %c0_i32_0 = arith.constant 0 : i32
    %c0_i32_1 = arith.constant 0 : i32
    %c0_i32_2 = arith.constant 0 : i32
    return %arg0, %c0_i32, %c0_i32_0, %c0_i32_1 : i32, i32, i32, i32
  }
  func.func @transform_1(%arg0: i32) -> (i32, i32, i32) {
    %c0_i32 = arith.constant 0 : i32
    %c0_i32_0 = arith.constant 0 : i32
    %c0_i32_1 = arith.constant 0 : i32
    %c0_i32_2 = arith.constant 0 : i32
    return %c0_i32, %c0_i32_0, %c0_i32_1 : i32, i32, i32
  }
  func.func @transform_2(%arg0: i32) -> (i32, i32, i32) {
    %c0_i32 = arith.constant 0 : i32
    %c0_i32_0 = arith.constant 0 : i32
    %c0_i32_1 = arith.constant 0 : i32
    return %arg0, %c0_i32, %c0_i32_0 : i32, i32, i32
  }
  func.func @transform_3(%arg0: i32) -> (i32, i32, i32) {
    %c0_i32 = arith.constant 0 : i32
    %c0_i32_0 = arith.constant 0 : i32
    %c0_i32_1 = arith.constant 0 : i32
    return %arg0, %c0_i32, %c0_i32_0 : i32, i32, i32
  }
}

</mosaic_0001>

<llo_original>
// kernel: tile.18
$region0: #{tile.18}
  #allocation0 [shape = 's32[1]{0}', space=sflag, size = 0x4, scoped, tag = 'scoped memory for tile.18']
  %s0 = inlined_call_operand.vmem [shape: f32[4], index: 0, kind: input, shape index: {}]
  %s1 = inlined_call_operand.vmem [shape: f32[4,4], index: 1, kind: output, shape index: {}]
  // Predicated region
  $region2: #{tile.18} parent=0 // pred_check
    _
  $region3: #{tile.18} parent=0 // pred_check_branch
    %3 = sbr.rel (0) target = $region5
  $region4: #{tile.18} parent=0 // pred_region
    _
  $region5: #{tile.18} parent=0 // pred_fallthru
    _
  %v4 = vld [vmem:[%s0] ss:$0 sm:$0xff]
  %5 = vst [vmem:[%s1] sm:$0xf] %v4

// kernel: unet_up.1
$region0: #{unet_up.1}
  #allocation0 [shape = 'u32[]', space=smem, size = 0x4, offset = 0x4, fixed_abs, tag = 'smem constant byte address 0x4 - core index']
  #allocation1 [shape = 'u32[144,128]{1,0:T(1,128)}', space=vmem, size = 0x12000, scoped, tag = 'internal scratch']
  %s0 = inlined_call_operand.vmem [shape: bf16[4,10,18,4], index: 0, kind: input, shape index: {}]
  %s1 = inlined_call_operand.vmem [shape: bf16[4,16,4], index: 1, kind: input, shape index: {}]
  %s2 = inlined_call_operand.vmem [shape: f32[4,128,16], index: 2, kind: output, shape index: {0}]
  %s3 = inlined_call_operand.vmem [shape: f32[4,2,16], index: 3, kind: output, shape index: {1}]
  %4 = xla_tuple %s2, %s3
  %s5 = sld [smem:[#allocation0]]
  $region49: #{unet_up.1} parent=0
    _
  %s7 = ssub.s32 1, %s5
  %s8 = scalar_select 0, %s7, %s5
  loop: start=0, step=1, limit=6
  $region2: #{unet_up.1} parent=0 // loop_pre_header
    _
  $region3: #{unet_up.1} parent=0 // loop_header
    %s10 = sphi 0, %s14
    %p11 = scmp.ge.s32.totalorder %s10, 6
    %s20 = sphi 0, %s22
    %s23 = sphi 0, %s20
    %s24 = sphi 0, %s23
    %s40 = sphi 0, %s24
    %s44 = sphi 0, %s44
    %s46 = sphi 0, %s44
    %s47 = sphi 0, %s46
    %s61 = sphi 0, %s47
    %s67 = sphi 0, %s69
    %s70 = sphi 0, %s67
    %s71 = sphi 0, %s70
    %s87 = sphi 0, %s71
    %s93 = sphi 0, %s95
    %s96 = sphi 0, %s93
    %s97 = sphi 0, %s96
    %s113 = sphi 0, %s97
  $region4: #{unet_up.1} parent=0 // loop_header_branch
    %13 = sbr.rel (%p11) target = $region8
  $region5: #{unet_up.1} parent=0 // loop_body
    %s15 = ssub.s32 %s10, 1
    %s16 = ssub.s32 %s10, 2
    %s17 = sadd.s32 %s10, 1
    %s18 = ssub.s32 %s10, %s17
    %p19 = scmp.eq.s32.totalorder %s18, 0
    %s21 = sadd.s32 %s20, 1
    %s22 = scalar_select %p19, %s20, %s21
    %p25 = pneg %p19
    %p26 = scmp.eq.s32.totalorder %s10, 3
    %p27 = por %p25, %p26
    %p28 = scmp.ne.s32.totalorder %s20, %s23
    %p29 = scmp.eq.s32.totalorder %s10, 0
    %p30 = por %p28, %p29
    %p31 = scmp.ne.s32.totalorder %s20, %s23
    %p32 = scmp.eq.s32.totalorder %s15, 3
    %p33 = por %p31, %p32
    %p34 = scmp.ne.s32.totalorder %s23, %s24
    %p35 = scmp.eq.s32.totalorder %s15, 0
    %p36 = por %p34, %p35
    %p37 = scmp.ne.s32.totalorder %s23, %s24
    %p38 = scmp.eq.s32.totalorder %s16, 3
    %p39 = por %p37, %p38
    %p41 = scmp.ne.s32.totalorder %s24, %s40
    %p42 = scmp.eq.s32.totalorder %s16, 0
    %p43 = por %p41, %p42
    %s45 = sadd.s32 %s44, 1
    %p48 = scmp.eq.s32.totalorder %s10, 3
    %p49 = scmp.ne.s32.totalorder %s44, %s46
    %p50 = scmp.eq.s32.totalorder %s10, 0
    %p51 = por %p49, %p50
    %p52 = scmp.ne.s32.totalorder %s44, %s46
    %p53 = scmp.eq.s32.totalorder %s15, 3
    %p54 = por %p52, %p53
    %p55 = scmp.ne.s32.totalorder %s46, %s47
    %p56 = scmp.eq.s32.totalorder %s15, 0
    %p57 = por %p55, %p56
    %p58 = scmp.ne.s32.totalorder %s46, %s47
    %p59 = scmp.eq.s32.totalorder %s16, 3
    %p60 = por %p58, %p59
    %p62 = scmp.ne.s32.totalorder %s47, %s61
    %p63 = scmp.eq.s32.totalorder %s16, 0
    %p64 = por %p62, %p63
    %s65 = ssub.s32 %s10, %s17
    %p66 = scmp.eq.s32.totalorder %s65, 0
    %s68 = sadd.s32 %s67, 1
    %s69 = scalar_select %p66, %s67, %s68
    %p72 = pneg %p66
    %p73 = scmp.eq.s32.totalorder %s10, 3
    %p74 = por %p72, %p73
    %p75 = scmp.ne.s32.totalorder %s67, %s70
    %p76 = scmp.eq.s32.totalorder %s10, 0
    %p77 = por %p75, %p76
    %p78 = scmp.ne.s32.totalorder %s67, %s70
    %p79 = scmp.eq.s32.totalorder %s15, 3
    %p80 = por %p78, %p79
    %p81 = scmp.ne.s32.totalorder %s70, %s71
    %p82 = scmp.eq.s32.totalorder %s15, 0
    %p83 = por %p81, %p82
    %p84 = scmp.ne.s32.totalorder %s70, %s71
    %p85 = scmp.eq.s32.totalorder %s16, 3
    %p86 = por %p84, %p85
    %p88 = scmp.ne.s32.totalorder %s71, %s87
    %p89 = scmp.eq.s32.totalorder %s16, 0
    %p90 = por %p88, %p89
    %s91 = ssub.s32 %s10, %s17
    %p92 = scmp.eq.s32.totalorder %s91, 0
    %s94 = sadd.s32 %s93, 1
    %s95 = scalar_select %p92, %s93, %s94
    %p98 = pneg %p92
    %p99 = scmp.eq.s32.totalorder %s10, 3
    %p100 = por %p98, %p99
    %p101 = scmp.ne.s32.totalorder %s93, %s96
    %p102 = scmp.eq.s32.totalorder %s10, 0
    %p103 = por %p101, %p102
    %p104 = scmp.ne.s32.totalorder %s93, %s96
    %p105 = scmp.eq.s32.totalorder %s15, 3
    %p106 = por %p104, %p105
    %p107 = scmp.ne.s32.totalorder %s96, %s97
    %p108 = scmp.eq.s32.totalorder %s15, 0
    %p109 = por %p107, %p108
    %p110 = scmp.ne.s32.totalorder %s96, %s97
    %p111 = scmp.eq.s32.totalorder %s16, 3
    %p112 = por %p110, %p111
    %p114 = scmp.ne.s32.totalorder %s97, %s113
    %p115 = scmp.eq.s32.totalorder %s16, 0
    %p116 = por %p114, %p115
    %p117 = scmp.le.s32.totalorder 1, %s10
    %p118 = scmp.lt.s32.totalorder %s10, 5
    %p119 = pnand %p117, %p118
    %p120 = pneg %p119
    // Predicated region
    $region9: #{unet_up.1} parent=5 // pred_check
      _
    $region10: #{unet_up.1} parent=5 // pred_check_branch
      %122 = sbr.rel (%p119) target = $region12
    $region11: #{unet_up.1} parent=5 // pred_region
      %s123 = ssub.s32 %s10, 1
      // Predicated region
      $region13: #{unet_up.1} parent=11 // pred_check
        %p124 = pneg %p57
      $region14: #{unet_up.1} parent=11 // pred_check_branch
        %126 = sbr.rel (%p124) target = $region16
      $region15: #{unet_up.1} parent=11 // pred_region
        _
      $region16: #{unet_up.1} parent=11 // pred_fallthru
        _
    $region12: #{unet_up.1} parent=5 // pred_fallthru
      _
    %p127 = scmp.lt.s32.totalorder %s10, 4
    // Predicated region
    $region17: #{unet_up.1} parent=5 // pred_check
      %p128 = pneg %p127
    $region18: #{unet_up.1} parent=5 // pred_check_branch
      %130 = sbr.rel (%p128) target = $region20
    $region19: #{unet_up.1} parent=5 // pred_region
      // Predicated region
      $region21: #{unet_up.1} parent=19 // pred_check
        %p131 = pneg %p30
      $region22: #{unet_up.1} parent=19 // pred_check_branch
        %133 = sbr.rel (%p131) target = $region24
      $region23: #{unet_up.1} parent=19 // pred_region
        %p134 = scmp.lt.s32.totalorder %s10, 3
        %s135 = scalar_select %p134, %s10, 3
        %s136 = smul.addr %s135, 30
        %s137 = smul.addr %s136, 4
        %s138 = scalar_lea.vmem %s0, %s137
      $region24: #{unet_up.1} parent=19 // pred_fallthru
        _
    $region20: #{unet_up.1} parent=5 // pred_fallthru
      _
    %p139 = scmp.le.s32.totalorder 1, %s10
    %p140 = scmp.lt.s32.totalorder %s10, 5
    %p141 = pnand %p139, %p140
    %p142 = pneg %p141
    // Predicated region
    $region25: #{unet_up.1} parent=5 // pred_check
      _
    $region26: #{unet_up.1} parent=5 // pred_check_branch
      %144 = sbr.rel (%p141) target = $region28
    $region27: #{unet_up.1} parent=5 // pred_region
      %s145 = ssub.s32 %s10, 1
      %p146 = scmp.lt.s32.totalorder %s15, 3
      %s147 = scalar_select %p146, %s15, 3
      %s148 = smul.addr %s147, 30
      %s149 = smul.addr %s148, 4
      %s150 = scalar_lea.vmem %s0, %s149
      %p151 = pneg %p36
      %p152 = pneg %p33
      %p153 = pneg %p57
      %p154 = pneg %p54
      %p155 = pneg %p83
      %p156 = pneg %p80
      %p157 = scmp.lt.s32.totalorder %s15, 3
      %s158 = scalar_select %p157, %s15, 3
      %s159 = smul.addr %s158, 16
      %s160 = smul.addr %s159, 8
      %s161 = scalar_lea.vmem %s2, %s160
      %p162 = pneg %p109
      %p163 = pneg %p106
      %p164 = scmp.lt.s32.totalorder %s15, 3
      %s165 = scalar_select %p164, %s15, 3
      %s166 = smul.addr %s165, 2
      %s167 = scalar_lea.vmem %s3, %s166
      %p168 = scmp.lt.s32.totalorder %s15, 3
      %s169 = scalar_select %p168, %s15, 3
      %s170 = smul.addr %s169, 30
      %s171 = smul.addr %s170, 4
      %s172 = scalar_lea.vmem %s0, %s171
      %p173 = scmp.lt.s32.totalorder %s15, 3
      %s174 = scalar_select %p173, %s15, 3
      %s175 = smul.addr %s174, 16
      %s176 = smul.addr %s175, 8
      %s177 = scalar_lea.vmem %s2, %s176
      %p178 = scmp.lt.s32.totalorder %s15, 3
      %s179 = scalar_select %p178, %s15, 3
      %s180 = smul.addr %s179, 2
      %s181 = scalar_lea.vmem %s3, %s180
      %v183 = vld [vmem:[%s172] sm:$0xf]
      %v184 = vld [vmem:[%s172 + $0x4] sm:$0xf]
      %v185 = vld [vmem:[%s172 + $0x8] sm:$0x1]
      %v186 = vld [vmem:[%s172 + $0xc] sm:$0xf]
      %v187 = vld [vmem:[%s172 + $0x10] sm:$0xf]
      %v188 = vld [vmem:[%s172 + $0x14] sm:$0x1]
      %v189 = vld [vmem:[%s172 + $0x18] sm:$0xf]
      %v190 = vld [vmem:[%s172 + $0x1c] sm:$0xf]
      %v191 = vld [vmem:[%s172 + $0x20] sm:$0x1]
      %v192 = vld [vmem:[%s172 + $0x24] sm:$0xf]
      %v193 = vld [vmem:[%s172 + $0x28] sm:$0xf]
      %v194 = vld [vmem:[%s172 + $0x2c] sm:$0x1]
      %v195 = vld [vmem:[%s172 + $0x30] sm:$0xf]
      %v196 = vld [vmem:[%s172 + $0x34] sm:$0xf]
      %v197 = vld [vmem:[%s172 + $0x38] sm:$0x1]
      %v198 = vld [vmem:[%s172 + $0x3c] sm:$0xf]
      %v199 = vld [vmem:[%s172 + $0x40] sm:$0xf]
      %v200 = vld [vmem:[%s172 + $0x44] sm:$0x1]
      %v201 = vld [vmem:[%s172 + $0x48] sm:$0xf]
      %v202 = vld [vmem:[%s172 + $0x4c] sm:$0xf]
      %v203 = vld [vmem:[%s172 + $0x50] sm:$0x1]
      %v204 = vld [vmem:[%s172 + $0x54] sm:$0xf]
      %v205 = vld [vmem:[%s172 + $0x58] sm:$0xf]
      %v206 = vld [vmem:[%s172 + $0x5c] sm:$0x1]
      %v207 = vld [vmem:[%s172 + $0x60] sm:$0xf]
      %v208 = vld [vmem:[%s172 + $0x64] sm:$0xf]
      %v209 = vld [vmem:[%s172 + $0x68] sm:$0x1]
      %v210 = vld [vmem:[%s172 + $0x6c] sm:$0xf]
      %v211 = vld [vmem:[%s172 + $0x70] sm:$0xf]
      %v212 = vld [vmem:[%s172 + $0x74] sm:$0x1]
      %v229 = vunpack.c.l.b16 %v183
      %v230 = vunpack.c.l.b16 %v184
      %v231 = vunpack.c.l.b16 %v186
      %v232 = vunpack.c.l.b16 %v187
      %v233 = vunpack.c.l.b16 %v189
      %v234 = vunpack.c.l.b16 %v190
      %v235 = vunpack.c.l.b16 %v192
      %v236 = vunpack.c.l.b16 %v193
      %v237 = vunpack.c.l.b16 %v195
      %v238 = vunpack.c.l.b16 %v196
      %v239 = vunpack.c.l.b16 %v198
      %v240 = vunpack.c.l.b16 %v199
      %v241 = vunpack.c.l.b16 %v201
      %v242 = vunpack.c.l.b16 %v202
      %v243 = vunpack.c.l.b16 %v204
      %v244 = vunpack.c.l.b16 %v205
      %v245 = vpack.c.b16 %v230, %v229
      %v246 = vpack.c.b16 %v232, %v231
      %v247 = vpack.c.b16 %v234, %v233
      %v248 = vpack.c.b16 %v236, %v235
      %v249 = vpack.c.b16 %v238, %v237
      %v250 = vpack.c.b16 %v240, %v239
      %v251 = vpack.c.b16 %v242, %v241
      %v252 = vpack.c.b16 %v244, %v243
      %v261 = vunpack.c.l.b16 %v185
      %v262 = vunpack.c.l.b16 %v188
      %v263 = vunpack.c.l.b16 %v191
      %v264 = vunpack.c.l.b16 %v194
      %v265 = vunpack.c.l.b16 %v197
      %v266 = vunpack.c.l.b16 %v200
      %v267 = vunpack.c.l.b16 %v203
      %v268 = vunpack.c.l.b16 %v206
      %v269 = vpack.c.b16 %v261, %v261
      %v270 = vpack.c.b16 %v262, %v262
      %v271 = vpack.c.b16 %v263, %v263
      %v272 = vpack.c.b16 %v264, %v264
      %v273 = vpack.c.b16 %v265, %v265
      %v274 = vpack.c.b16 %v266, %v266
      %v275 = vpack.c.b16 %v267, %v267
      %v276 = vpack.c.b16 %v268, %v268
      %vm277 = vsmask.f32 7424
      %v279 = vshrl.u32 %v245, 16
      %v281 = vshll.u32 %v245, 16
      %v283 = vrot.slane %v281, 1
      %v284 = vor.u32 %v279, %v283
      %v286 = vshll.u32 %v269, 16
      %v288 = vrot.slane %v286, 1
      %v289 = vsel %vm277, %v284, %v288
      %v291 = vshrl.u32 %v246, 16
      %v293 = vshll.u32 %v246, 16
      %v295 = vrot.slane %v293, 1
      %v296 = vor.u32 %v291, %v295
      %v298 = vshll.u32 %v270, 16
      %v300 = vrot.slane %v298, 1
      %v301 = vsel %vm277, %v296, %v300
      %v303 = vshrl.u32 %v247, 16
      %v305 = vshll.u32 %v247, 16
      %v307 = vrot.slane %v305, 1
      %v308 = vor.u32 %v303, %v307
      %v310 = vshll.u32 %v271, 16
      %v312 = vrot.slane %v310, 1
      %v313 = vsel %vm277, %v308, %v312
      %v315 = vshrl.u32 %v248, 16
      %v317 = vshll.u32 %v248, 16
      %v319 = vrot.slane %v317, 1
      %v320 = vor.u32 %v315, %v319
      %v322 = vshll.u32 %v272, 16
      %v324 = vrot.slane %v322, 1
      %v325 = vsel %vm277, %v320, %v324
      %v327 = vshrl.u32 %v249, 16
      %v329 = vshll.u32 %v249, 16
      %v331 = vrot.slane %v329, 1
      %v332 = vor.u32 %v327, %v331
      %v334 = vshll.u32 %v273, 16
      %v336 = vrot.slane %v334, 1
      %v337 = vsel %vm277, %v332, %v336
      %v339 = vshrl.u32 %v250, 16
      %v341 = vshll.u32 %v250, 16
      %v343 = vrot.slane %v341, 1
      %v344 = vor.u32 %v339, %v343
      %v346 = vshll.u32 %v274, 16
      %v348 = vrot.slane %v346, 1
      %v349 = vsel %vm277, %v344, %v348
      %v351 = vshrl.u32 %v251, 16
      %v353 = vshll.u32 %v251, 16
      %v355 = vrot.slane %v353, 1
      %v356 = vor.u32 %v351, %v355
      %v358 = vshll.u32 %v275, 16
      %v360 = vrot.slane %v358, 1
      %v361 = vsel %vm277, %v356, %v360
      %v363 = vshrl.u32 %v252, 16
      %v365 = vshll.u32 %v252, 16
      %v367 = vrot.slane %v365, 1
      %v368 = vor.u32 %v363, %v367
      %v370 = vshll.u32 %v276, 16
      %v372 = vrot.slane %v370, 1
      %v373 = vsel %vm277, %v368, %v372
      %374 = vrot.lane.b32.xlu0 %v289, 4
      %v375 = vpop.permute.xlu0 %374
      %376 = vrot.lane.b32.xlu0 %v301, 4
      %v377 = vpop.permute.xlu0 %376
      %378 = vrot.lane.b32.xlu0 %v313, 4
      %v379 = vpop.permute.xlu0 %378
      %380 = vrot.lane.b32.xlu0 %v325, 4
      %v381 = vpop.permute.xlu0 %380
      %382 = vrot.lane.b32.xlu0 %v337, 4
      %v383 = vpop.permute.xlu0 %382
      %384 = vrot.lane.b32.xlu0 %v349, 4
      %v385 = vpop.permute.xlu0 %384
      %386 = vrot.lane.b32.xlu0 %v361, 4
      %v387 = vpop.permute.xlu0 %386
      %388 = vrot.lane.b32.xlu0 %v373, 4
      %v389 = vpop.permute.xlu0 %388
      %v392 = vunpack.c.l.b16 %v207
      %v393 = vunpack.c.l.b16 %v208
      %v394 = vpack.c.b16 %v393, %v392
      %395 = vrot.lane.b32.xlu0 %v246, 8
      %v396 = vpop.permute.xlu0 %395
      %397 = vrot.lane.b32.xlu0 %v247, 8
      %v398 = vpop.permute.xlu0 %397
      %399 = vrot.lane.b32.xlu0 %v248, 8
      %v400 = vpop.permute.xlu0 %399
      %401 = vrot.lane.b32.xlu0 %v249, 8
      %v402 = vpop.permute.xlu0 %401
      %403 = vrot.lane.b32.xlu0 %v250, 8
      %v404 = vpop.permute.xlu0 %403
      %405 = vrot.lane.b32.xlu0 %v251, 8
      %v406 = vpop.permute.xlu0 %405
      %407 = vrot.lane.b32.xlu0 %v252, 8
      %v408 = vpop.permute.xlu0 %407
      %409 = vrot.lane.b32.xlu0 %v394, 8
      %v410 = vpop.permute.xlu0 %409
      %v412 = vunpack.c.l.b16 %v209
      %v413 = vpack.c.b16 %v412, %v412
      %v415 = vshrl.u32 %v394, 16
      %v417 = vshll.u32 %v394, 16
      %v419 = vrot.slane %v417, 1
      %v420 = vor.u32 %v415, %v419
      %v422 = vshll.u32 %v413, 16
      %v424 = vrot.slane %v422, 1
      %v425 = vsel %vm277, %v420, %v424
      %426 = vrot.lane.b32.xlu0 %v301, 12
      %v427 = vpop.permute.xlu0 %426
      %428 = vrot.lane.b32.xlu0 %v313, 12
      %v429 = vpop.permute.xlu0 %428
      %430 = vrot.lane.b32.xlu0 %v325, 12
      %v431 = vpop.permute.xlu0 %430
      %432 = vrot.lane.b32.xlu0 %v337, 12
      %v433 = vpop.permute.xlu0 %432
      %434 = vrot.lane.b32.xlu0 %v349, 12
      %v435 = vpop.permute.xlu0 %434
      %436 = vrot.lane.b32.xlu0 %v361, 12
      %v437 = vpop.permute.xlu0 %436
      %438 = vrot.lane.b32.xlu0 %v373, 12
      %v439 = vpop.permute.xlu0 %438
      %440 = vrot.lane.b32.xlu0 %v425, 12
      %v441 = vpop.permute.xlu0 %440
      %vm442 = vcmask 31744
      %v444 = vsel %vm442, %v245, %v375
      %v446 = vsel %vm442, %v246, %v377
      %v448 = vsel %vm442, %v247, %v379
      %v450 = vsel %vm442, %v248, %v381
      %v452 = vsel %vm442, %v249, %v383
      %v454 = vsel %vm442, %v250, %v385
      %v456 = vsel %vm442, %v251, %v387
      %v458 = vsel %vm442, %v252, %v389
      %vm459 = vcmask 64512
      %v461 = vsel %vm459, %v444, %v396
      %v463 = vsel %vm459, %v446, %v398
      %v465 = vsel %vm459, %v448, %v400
      %v467 = vsel %vm459, %v450, %v402
      %v469 = vsel %vm459, %v452, %v404
      %v471 = vsel %vm459, %v454, %v406
      %v473 = vsel %vm459, %v456, %v408
      %v475 = vsel %vm459, %v458, %v410
      %vm476 = vcmask 97280
      %v478 = vsel %vm476, %v461, %v427
      %v480 = vsel %vm476, %v463, %v429
      %v482 = vsel %vm476, %v465, %v431
      %v484 = vsel %vm476, %v467, %v433
      %v486 = vsel %vm476, %v469, %v435
      %v488 = vsel %vm476, %v471, %v437
      %v490 = vsel %vm476, %v473, %v439
      %v492 = vsel %vm476, %v475, %v441
      %v493 = vld [vmem:[%s1] sm:$0xf]
      %v494 = vld [vmem:[%s1 + $0x4] sm:$0xf]
      %v497 = vunpack.c.l.b16 %v493
      %v498 = vunpack.c.l.b16 %v494
      %v499 = vpack.c.b16 %v498, %v497
      %vm501 = vcmask 130048
      %v502 = vsel %vm501, %v478, 0
      %v504 = vsel %vm501, %v480, 0
      %v506 = vsel %vm501, %v482, 0
      %v508 = vsel %vm501, %v484, 0
      %v510 = vsel %vm501, %v486, 0
      %v512 = vsel %vm501, %v488, 0
      %v514 = vsel %vm501, %v490, 0
      %v516 = vsel %vm501, %v492, 0
      %518 = vmatprep.subr.bf16.mxu0 0
      %519 = vmatpush1.bf16.msra.mxu0 %v499
      %520 = vmatprep.subr.bf16.mxu0 0
      %521 = vmatpush1.bf16.msra.mxu0 0
      %522 = vmatprep.subr.bf16.mxu0 0
      %523 = vmatpush1.bf16.msra.mxu0 0
      %524 = vmatprep.subr.bf16.mxu0 0
      %525 = vmatpush1.bf16.msra.mxu0 0
      %526 = vmatprep.subr.bf16.mxu0 0
      %527 = vmatpush1.bf16.msra.mxu0 0
      %528 = vmatprep.subr.bf16.mxu0 0
      %529 = vmatpush1.bf16.msra.mxu0 0
      %530 = vmatprep.subr.bf16.mxu0 0
      %531 = vmatpush1.bf16.msra.mxu0 0
      %532 = vmatprep.subr.bf16.mxu0 0
      %533 = vmatpush1.bf16.msra.mxu0 0
      %534 = vmatprep.subr.bf16.mxu0 0
      %535 = vmatpush1.bf16.msra.mxu0 0
      %536 = vmatprep.subr.bf16.mxu0 0
      %537 = vmatpush1.bf16.msra.mxu0 0
      %538 = vmatprep.subr.bf16.mxu0 0
      %539 = vmatpush1.bf16.msra.mxu0 0
      %540 = vmatprep.subr.bf16.mxu0 0
      %541 = vmatpush1.bf16.msra.mxu0 0
      %542 = vmatprep.subr.bf16.mxu0 0
      %543 = vmatpush1.bf16.msra.mxu0 0
      %544 = vmatprep.subr.bf16.mxu0 0
      %545 = vmatpush1.bf16.msra.mxu0 0
      %546 = vmatprep.subr.bf16.mxu0 0
      %547 = vmatpush1.bf16.msra.mxu0 0
      %548 = vmatprep.subr.bf16.mxu0 0
      %549 = vmatpush1.bf16.msra.mxu0 0
      %550 = vmatprep.mubr.bf16.mxu0 0
      %551 = vmatmul.mubr.bf16.gmra.mrb[0].mxu0 %v502
      %v552 = vpop.f32.mrb[0].mxu0
      %v553 = vadd.f32 0.0, %v552
      %v554 = vpop.f32.mrb[0].mxu0
      %v555 = vpop.f32.mrb[0].mxu0
      %v556 = vadd.f32 0.0, %v555
      %v557 = vpop.f32.mrb[0].mxu0
      %558 = vmatprep.mubr.bf16.mxu0 0
      %559 = vmatmul.mubr.bf16.gmra.mrb[0].mxu0 %v504
      %v560 = vpop.f32.mrb[0].mxu0
      %v561 = vadd.f32 0.0, %v560
      %v562 = vpop.f32.mrb[0].mxu0
      %v563 = vpop.f32.mrb[0].mxu0
      %v564 = vadd.f32 0.0, %v563
      %v565 = vpop.f32.mrb[0].mxu0
      %566 = vmatprep.mubr.bf16.mxu0 0
      %567 = vmatmul.mubr.bf16.gmra.mrb[0].mxu0 %v506
      %v568 = vpop.f32.mrb[0].mxu0
      %v569 = vadd.f32 0.0, %v568
      %v570 = vpop.f32.mrb[0].mxu0
      %v571 = vpop.f32.mrb[0].mxu0
      %v572 = vadd.f32 0.0, %v571
      %v573 = vpop.f32.mrb[0].mxu0
      %574 = vmatprep.mubr.bf16.mxu0 0
      %575 = vmatmul.mubr.bf16.gmra.mrb[0].mxu0 %v508
      %v576 = vpop.f32.mrb[0].mxu0
      %v577 = vadd.f32 0.0, %v576
      %v578 = vpop.f32.mrb[0].mxu0
      %v579 = vpop.f32.mrb[0].mxu0
      %v580 = vadd.f32 0.0, %v579
      %v581 = vpop.f32.mrb[0].mxu0
      %582 = vmatprep.mubr.bf16.mxu0 0
      %583 = vmatmul.mubr.bf16.gmra.mrb[0].mxu0 %v510
      %v584 = vpop.f32.mrb[0].mxu0
      %v585 = vadd.f32 0.0, %v584
      %v586 = vpop.f32.mrb[0].mxu0
      %v587 = vpop.f32.mrb[0].mxu0
      %v588 = vadd.f32 0.0, %v587
      %v589 = vpop.f32.mrb[0].mxu0
      %590 = vmatprep.mubr.bf16.mxu0 0
      %591 = vmatmul.mubr.bf16.gmra.mrb[0].mxu0 %v512
      %v592 = vpop.f32.mrb[0].mxu0
      %v593 = vadd.f32 0.0, %v592
      %v594 = vpop.f32.mrb[0].mxu0
      %v595 = vpop.f32.mrb[0].mxu0
      %v596 = vadd.f32 0.0, %v595
      %v597 = vpop.f32.mrb[0].mxu0
      %598 = vmatprep.mubr.bf16.mxu0 0
      %599 = vmatmul.mubr.bf16.gmra.mrb[0].mxu0 %v514
      %v600 = vpop.f32.mrb[0].mxu0
      %v601 = vadd.f32 0.0, %v600
      %v602 = vpop.f32.mrb[0].mxu0
      %v603 = vpop.f32.mrb[0].mxu0
      %v604 = vadd.f32 0.0, %v603
      %v605 = vpop.f32.mrb[0].mxu0
      %606 = vmatprep.mubr.bf16.mxu0 0
      %607 = vmatmul.mubr.bf16.gmra.mrb[0].mxu0 %v516
      %v608 = vpop.f32.mrb[0].mxu0
      %v609 = vadd.f32 0.0, %v608
      %v610 = vpop.f32.mrb[0].mxu0
      %v611 = vpop.f32.mrb[0].mxu0
      %v612 = vadd.f32 0.0, %v611
      %v613 = vpop.f32.mrb[0].mxu0
      %614 = vdwg.mxu0
      %v615 = vshrl.u32 %v269, 16
      %v617 = vshrl.u32 %v270, 16
      %v619 = vshrl.u32 %v271, 16
      %v621 = vshrl.u32 %v272, 16
      %v623 = vshrl.u32 %v273, 16
      %v625 = vshrl.u32 %v274, 16
      %v627 = vshrl.u32 %v275, 16
      %v629 = vshrl.u32 %v276, 16
      %631 = vrot.lane.b32.xlu0 %v615, 4
      %v632 = vpop.permute.xlu0 %631
      %633 = vrot.lane.b32.xlu0 %v617, 4
      %v634 = vpop.permute.xlu0 %633
      %635 = vrot.lane.b32.xlu0 %v619, 4
      %v636 = vpop.permute.xlu0 %635
      %637 = vrot.lane.b32.xlu0 %v621, 4
      %v638 = vpop.permute.xlu0 %637
      %639 = vrot.lane.b32.xlu0 %v623, 4
      %v640 = vpop.permute.xlu0 %639
      %641 = vrot.lane.b32.xlu0 %v625, 4
      %v642 = vpop.permute.xlu0 %641
      %643 = vrot.lane.b32.xlu0 %v627, 4
      %v644 = vpop.permute.xlu0 %643
      %645 = vrot.lane.b32.xlu0 %v629, 4
      %v646 = vpop.permute.xlu0 %645
      %647 = vrot.lane.b32.xlu0 %v270, 8
      %v648 = vpop.permute.xlu0 %647
      %649 = vrot.lane.b32.xlu0 %v271, 8
      %v650 = vpop.permute.xlu0 %649
      %651 = vrot.lane.b32.xlu0 %v272, 8
      %v652 = vpop.permute.xlu0 %651
      %653 = vrot.lane.b32.xlu0 %v273, 8
      %v654 = vpop.permute.xlu0 %653
      %655 = vrot.lane.b32.xlu0 %v274, 8
      %v656 = vpop.permute.xlu0 %655
      %657 = vrot.lane.b32.xlu0 %v275, 8
      %v658 = vpop.permute.xlu0 %657
      %659 = vrot.lane.b32.xlu0 %v276, 8
      %v660 = vpop.permute.xlu0 %659
      %661 = vrot.lane.b32.xlu0 %v413, 8
      %v662 = vpop.permute.xlu0 %661
      %v663 = vshrl.u32 %v413, 16
      %665 = vrot.lane.b32.xlu0 %v617, 12
      %v666 = vpop.permute.xlu0 %665
      %667 = vrot.lane.b32.xlu0 %v619, 12
      %v668 = vpop.permute.xlu0 %667
      %669 = vrot.lane.b32.xlu0 %v621, 12
      %v670 = vpop.permute.xlu0 %669
      %671 = vrot.lane.b32.xlu0 %v623, 12
      %v672 = vpop.permute.xlu0 %671
      %673 = vrot.lane.b32.xlu0 %v625, 12
      %v674 = vpop.permute.xlu0 %673
      %675 = vrot.lane.b32.xlu0 %v627, 12
      %v676 = vpop.permute.xlu0 %675
      %677 = vrot.lane.b32.xlu0 %v629, 12
      %v678 = vpop.permute.xlu0 %677
      %679 = vrot.lane.b32.xlu0 %v663, 12
      %v680 = vpop.permute.xlu0 %679
      %v682 = vsel %vm442, %v269, %v632
      %v684 = vsel %vm442, %v270, %v634
      %v686 = vsel %vm442, %v271, %v636
      %v688 = vsel %vm442, %v272, %v638
      %v690 = vsel %vm442, %v273, %v640
      %v692 = vsel %vm442, %v274, %v642
      %v694 = vsel %vm442, %v275, %v644
      %v696 = vsel %vm442, %v276, %v646
      %v698 = vsel %vm459, %v682, %v648
      %v700 = vsel %vm459, %v684, %v650
      %v702 = vsel %vm459, %v686, %v652
      %v704 = vsel %vm459, %v688, %v654
      %v706 = vsel %vm459, %v690, %v656
      %v708 = vsel %vm459, %v692, %v658
      %v710 = vsel %vm459, %v694, %v660
      %v712 = vsel %vm459, %v696, %v662
      %v714 = vsel %vm476, %v698, %v666
      %v716 = vsel %vm476, %v700, %v668
      %v718 = vsel %vm476, %v702, %v670
      %v720 = vsel %vm476, %v704, %v672
      %v722 = vsel %vm476, %v706, %v674
      %v724 = vsel %vm476, %v708, %v676
      %v726 = vsel %vm476, %v710, %v678
      %v728 = vsel %vm476, %v712, %v680
      %v729 = vshrl.u32 %v478, 16
      %v731 = vshll.u32 %v478, 16
      %v733 = vrot.slane %v731, 1
      %v734 = vor.u32 %v729, %v733
      %v735 = vshll.u32 %v714, 16
      %v737 = vrot.slane %v735, 1
      %v738 = vsel %vm277, %v734, %v737
      %v739 = vshrl.u32 %v480, 16
      %v741 = vshll.u32 %v480, 16
      %v743 = vrot.slane %v741, 1
      %v744 = vor.u32 %v739, %v743
      %v745 = vshll.u32 %v716, 16
      %v747 = vrot.slane %v745, 1
      %v748 = vsel %vm277, %v744, %v747
      %v749 = vshrl.u32 %v482, 16
      %v751 = vshll.u32 %v482, 16
      %v753 = vrot.slane %v751, 1
      %v754 = vor.u32 %v749, %v753
      %v755 = vshll.u32 %v718, 16
      %v757 = vrot.slane %v755, 1
      %v758 = vsel %vm277, %v754, %v757
      %v759 = vshrl.u32 %v484, 16
      %v761 = vshll.u32 %v484, 16
      %v763 = vrot.slane %v761, 1
      %v764 = vor.u32 %v759, %v763
      %v765 = vshll.u32 %v720, 16
      %v767 = vrot.slane %v765, 1
      %v768 = vsel %vm277, %v764, %v767
      %v769 = vshrl.u32 %v486, 16
      %v771 = vshll.u32 %v486, 16
      %v773 = vrot.slane %v771, 1
      %v774 = vor.u32 %v769, %v773
      %v775 = vshll.u32 %v722, 16
      %v777 = vrot.slane %v775, 1
      %v778 = vsel %vm277, %v774, %v777
      %v779 = vshrl.u32 %v488, 16
      %v781 = vshll.u32 %v488, 16
      %v783 = vrot.slane %v781, 1
      %v784 = vor.u32 %v779, %v783
      %v785 = vshll.u32 %v724, 16
      %v787 = vrot.slane %v785, 1
      %v788 = vsel %vm277, %v784, %v787
      %v789 = vshrl.u32 %v490, 16
      %v791 = vshll.u32 %v490, 16
      %v793 = vrot.slane %v791, 1
      %v794 = vor.u32 %v789, %v793
      %v795 = vshll.u32 %v726, 16
      %v797 = vrot.slane %v795, 1
      %v798 = vsel %vm277, %v794, %v797
      %v799 = vshrl.u32 %v492, 16
      %v801 = vshll.u32 %v492, 16
      %v803 = vrot.slane %v801, 1
      %v804 = vor.u32 %v799, %v803
      %v805 = vshll.u32 %v728, 16
      %v807 = vrot.slane %v805, 1
      %v808 = vsel %vm277, %v804, %v807
      %s809 = scalar_lea.vmem %s1, 8
      %v810 = vld [vmem:[%s809] sm:$0xf]
      %v811 = vld [vmem:[%s809 + $0x4] sm:$0xf]
      %v814 = vunpack.c.l.b16 %v810
      %v815 = vunpack.c.l.b16 %v811
      %v816 = vpack.c.b16 %v815, %v814
      %v819 = vsel %vm501, %v738, 0
      %v822 = vsel %vm501, %v748, 0
      %v825 = vsel %vm501, %v758, 0
      %v828 = vsel %vm501, %v768, 0
      %v831 = vsel %vm501, %v778, 0
      %v834 = vsel %vm501, %v788, 0
      %v837 = vsel %vm501, %v798, 0
      %v840 = vsel %vm501, %v808, 0
      %842 = vmatprep.subr.bf16.mxu0 0
      %843 = vmatpush1.bf16.msra.mxu0 %v816
      %844 = vmatprep.subr.bf16.mxu0 0
      %845 = vmatpush1.bf16.msra.mxu0 0
      %846 = vmatprep.subr.bf16.mxu0 0
      %847 = vmatpush1.bf16.msra.mxu0 0
      %848 = vmatprep.subr.bf16.mxu0 0
      %849 = vmatpush1.bf16.msra.mxu0 0
      %850 = vmatprep.subr.bf16.mxu0 0
      %851 = vmatpush1.bf16.msra.mxu0 0
      %852 = vmatprep.subr.bf16.mxu0 0
      %853 = vmatpush1.bf16.msra.mxu0 0
      %854 = vmatprep.subr.bf16.mxu0 0
      %855 = vmatpush1.bf16.msra.mxu0 0
      %856 = vmatprep.subr.bf16.mxu0 0
      %857 = vmatpush1.bf16.msra.mxu0 0
      %858 = vmatprep.subr.bf16.mxu0 0
      %859 = vmatpush1.bf16.msra.mxu0 0
      %860 = vmatprep.subr.bf16.mxu0 0
      %861 = vmatpush1.bf16.msra.mxu0 0
      %862 = vmatprep.subr.bf16.mxu0 0
      %863 = vmatpush1.bf16.msra.mxu0 0
      %864 = vmatprep.subr.bf16.mxu0 0
      %865 = vmatpush1.bf16.msra.mxu0 0
      %866 = vmatprep.subr.bf16.mxu0 0
      %867 = vmatpush1.bf16.msra.mxu0 0
      %868 = vmatprep.subr.bf16.mxu0 0
      %869 = vmatpush1.bf16.msra.mxu0 0
      %870 = vmatprep.subr.bf16.mxu0 0
      %871 = vmatpush1.bf16.msra.mxu0 0
      %872 = vmatprep.subr.bf16.mxu0 0
      %873 = vmatpush1.bf16.msra.mxu0 0
      %874 = vmatprep.mubr.bf16.mxu0 0
      %875 = vmatmul.mubr.bf16.gmra.mrb[0].mxu0 %v819
      %v876 = vpop.f32.mrb[0].mxu0
      %v877 = vadd.f32 0.0, %v876
      %v878 = vpop.f32.mrb[0].mxu0
      %v879 = vpop.f32.mrb[0].mxu0
      %v880 = vadd.f32 0.0, %v879
      %v881 = vpop.f32.mrb[0].mxu0
      %882 = vmatprep.mubr.bf16.mxu0 0
      %883 = vmatmul.mubr.bf16.gmra.mrb[0].mxu0 %v822
      %v884 = vpop.f32.mrb[0].mxu0
      %v885 = vadd.f32 0.0, %v884
      %v886 = vpop.f32.mrb[0].mxu0
      %v887 = vpop.f32.mrb[0].mxu0
      %v888 = vadd.f32 0.0, %v887
      %v889 = vpop.f32.mrb[0].mxu0
      %890 = vmatprep.mubr.bf16.mxu0 0
      %891 = vmatmul.mubr.bf16.gmra.mrb[0].mxu0 %v825
      %v892 = vpop.f32.mrb[0].mxu0
      %v893 = vadd.f32 0.0, %v892
      %v894 = vpop.f32.mrb[0].mxu0
      %v895 = vpop.f32.mrb[0].mxu0
      %v896 = vadd.f32 0.0, %v895
      %v897 = vpop.f32.mrb[0].mxu0
      %898 = vmatprep.mubr.bf16.mxu0 0
      %899 = vmatmul.mubr.bf16.gmra.mrb[0].mxu0 %v828
      %v900 = vpop.f32.mrb[0].mxu0
      %v901 = vadd.f32 0.0, %v900
      %v902 = vpop.f32.mrb[0].mxu0
      %v903 = vpop.f32.mrb[0].mxu0
      %v904 = vadd.f32 0.0, %v903
      %v905 = vpop.f32.mrb[0].mxu0
      %906 = vmatprep.mubr.bf16.mxu0 0
      %907 = vmatmul.mubr.bf16.gmra.mrb[0].mxu0 %v831
      %v908 = vpop.f32.mrb[0].mxu0
      %v909 = vadd.f32 0.0, %v908
      %v910 = vpop.f32.mrb[0].mxu0
      %v911 = vpop.f32.mrb[0].mxu0
      %v912 = vadd.f32 0.0, %v911
      %v913 = vpop.f32.mrb[0].mxu0
      %914 = vmatprep.mubr.bf16.mxu0 0
      %915 = vmatmul.mubr.bf16.gmra.mrb[0].mxu0 %v834
      %v916 = vpop.f32.mrb[0].mxu0
      %v917 = vadd.f32 0.0, %v916
      %v918 = vpop.f32.mrb[0].mxu0
      %v919 = vpop.f32.mrb[0].mxu0
      %v920 = vadd.f32 0.0, %v919
      %v921 = vpop.f32.mrb[0].mxu0
      %922 = vmatprep.mubr.bf16.mxu0 0
      %923 = vmatmul.mubr.bf16.gmra.mrb[0].mxu0 %v837
      %v924 = vpop.f32.mrb[0].mxu0
      %v925 = vadd.f32 0.0, %v924
      %v926 = vpop.f32.mrb[0].mxu0
      %v927 = vpop.f32.mrb[0].mxu0
      %v928 = vadd.f32 0.0, %v927
      %v929 = vpop.f32.mrb[0].mxu0
      %930 = vmatprep.mubr.bf16.mxu0 0
      %931 = vmatmul.mubr.bf16.gmra.mrb[0].mxu0 %v840
      %v932 = vpop.f32.mrb[0].mxu0
      %v933 = vadd.f32 0.0, %v932
      %v934 = vpop.f32.mrb[0].mxu0
      %v935 = vpop.f32.mrb[0].mxu0
      %v936 = vadd.f32 0.0, %v935
      %v937 = vpop.f32.mrb[0].mxu0
      %938 = vdwg.mxu0
      %939 = vrot.lane.b32.xlu0 %v425, 4
      %v940 = vpop.permute.xlu0 %939
      %v943 = vunpack.c.l.b16 %v210
      %v944 = vunpack.c.l.b16 %v211
      %v945 = vpack.c.b16 %v944, %v943
      %946 = vrot.lane.b32.xlu0 %v945, 8
      %v947 = vpop.permute.xlu0 %946
      %v949 = vunpack.c.l.b16 %v212
      %v950 = vpack.c.b16 %v949, %v949
      %v952 = vshrl.u32 %v945, 16
      %v954 = vshll.u32 %v945, 16
      %v956 = vrot.slane %v954, 1
      %v957 = vor.u32 %v952, %v956
      %v959 = vshll.u32 %v950, 16
      %v961 = vrot.slane %v959, 1
      %v962 = vsel %vm277, %v957, %v961
      %963 = vrot.lane.b32.xlu0 %v962, 12
      %v964 = vpop.permute.xlu0 %963
      %v966 = vsel %vm442, %v394, %v940
      %v968 = vsel %vm459, %v966, %v947
      %v970 = vsel %vm476, %v968, %v964
      %s971 = scalar_lea.vmem %s1, 16
      %v972 = vld [vmem:[%s971] sm:$0xf]
      %v973 = vld [vmem:[%s971 + $0x4] sm:$0xf]
      %v976 = vunpack.c.l.b16 %v972
      %v977 = vunpack.c.l.b16 %v973
      %v978 = vpack.c.b16 %v977, %v976
      %v980 = vsel %vm501, %v970, 0
      %982 = vmatprep.subr.bf16.mxu0 0
      %983 = vmatpush1.bf16.msra.mxu0 %v978
      %984 = vmatprep.subr.bf16.mxu0 0
      %985 = vmatpush1.bf16.msra.mxu0 0
      %986 = vmatprep.subr.bf16.mxu0 0
      %987 = vmatpush1.bf16.msra.mxu0 0
      %988 = vmatprep.subr.bf16.mxu0 0
      %989 = vmatpush1.bf16.msra.mxu0 0
      %990 = vmatprep.subr.bf16.mxu0 0
      %991 = vmatpush1.bf16.msra.mxu0 0
      %992 = vmatprep.subr.bf16.mxu0 0
      %993 = vmatpush1.bf16.msra.mxu0 0
      %994 = vmatprep.subr.bf16.mxu0 0
      %995 = vmatpush1.bf16.msra.mxu0 0
      %996 = vmatprep.subr.bf16.mxu0 0
      %997 = vmatpush1.bf16.msra.mxu0 0
      %998 = vmatprep.subr.bf16.mxu0 0
      %999 = vmatpush1.bf16.msra.mxu0 0
      %1000 = vmatprep.subr.bf16.mxu0 0
      %1001 = vmatpush1.bf16.msra.mxu0 0
      %1002 = vmatprep.subr.bf16.mxu0 0
      %1003 = vmatpush1.bf16.msra.mxu0 0
      %1004 = vmatprep.subr.bf16.mxu0 0
      %1005 = vmatpush1.bf16.msra.mxu0 0
      %1006 = vmatprep.subr.bf16.mxu0 0
      %1007 = vmatpush1.bf16.msra.mxu0 0
      %1008 = vmatprep.subr.bf16.mxu0 0
      %1009 = vmatpush1.bf16.msra.mxu0 0
      %1010 = vmatprep.subr.bf16.mxu0 0
      %1011 = vmatpush1.bf16.msra.mxu0 0
      %1012 = vmatprep.subr.bf16.mxu0 0
      %1013 = vmatpush1.bf16.msra.mxu0 0
      %1014 = vmatprep.mubr.bf16.mxu0 0
      %1015 = vmatmul.mubr.bf16.gmra.mrb[0].mxu0 %v504
      %v1016 = vpop.f32.mrb[0].mxu0
      %v1017 = vadd.f32 0.0, %v1016
      %v1018 = vpop.f32.mrb[0].mxu0
      %v1019 = vpop.f32.mrb[0].mxu0
      %v1020 = vadd.f32 0.0, %v1019
      %v1021 = vpop.f32.mrb[0].mxu0
      %1022 = vmatprep.mubr.bf16.mxu0 0
      %1023 = vmatmul.mubr.bf16.gmra.mrb[0].mxu0 %v506
      %v1024 = vpop.f32.mrb[0].mxu0
      %v1025 = vadd.f32 0.0, %v1024
      %v1026 = vpop.f32.mrb[0].mxu0
      %v1027 = vpop.f32.mrb[0].mxu0
      %v1028 = vadd.f32 0.0, %v1027
      %v1029 = vpop.f32.mrb[0].mxu0
      %1030 = vmatprep.mubr.bf16.mxu0 0
      %1031 = vmatmul.mubr.bf16.gmra.mrb[0].mxu0 %v508
      %v1032 = vpop.f32.mrb[0].mxu0
      %v1033 = vadd.f32 0.0, %v1032
      %v1034 = vpop.f32.mrb[0].mxu0
      %v1035 = vpop.f32.mrb[0].mxu0
      %v1036 = vadd.f32 0.0, %v1035
      %v1037 = vpop.f32.mrb[0].mxu0
      %1038 = vmatprep.mubr.bf16.mxu0 0
      %1039 = vmatmul.mubr.bf16.gmra.mrb[0].mxu0 %v510
      %v1040 = vpop.f32.mrb[0].mxu0
      %v1041 = vadd.f32 0.0, %v1040
      %v1042 = vpop.f32.mrb[0].mxu0
      %v1043 = vpop.f32.mrb[0].mxu0
      %v1044 = vadd.f32 0.0, %v1043
      %v1045 = vpop.f32.mrb[0].mxu0
      %1046 = vmatprep.mubr.bf16.mxu0 0
      %1047 = vmatmul.mubr.bf16.gmra.mrb[0].mxu0 %v512
      %v1048 = vpop.f32.mrb[0].mxu0
      %v1049 = vadd.f32 0.0, %v1048
      %v1050 = vpop.f32.mrb[0].mxu0
      %v1051 = vpop.f32.mrb[0].mxu0
      %v1052 = vadd.f32 0.0, %v1051
      %v1053 = vpop.f32.mrb[0].mxu0
      %1054 = vmatprep.mubr.bf16.mxu0 0
      %1055 = vmatmul.mubr.bf16.gmra.mrb[0].mxu0 %v514
      %v1056 = vpop.f32.mrb[0].mxu0
      %v1057 = vadd.f32 0.0, %v1056
      %v1058 = vpop.f32.mrb[0].mxu0
      %v1059 = vpop.f32.mrb[0].mxu0
      %v1060 = vadd.f32 0.0, %v1059
      %v1061 = vpop.f32.mrb[0].mxu0
      %1062 = vmatprep.mubr.bf16.mxu0 0
      %1063 = vmatmul.mubr.bf16.gmra.mrb[0].mxu0 %v516
      %v1064 = vpop.f32.mrb[0].mxu0
      %v1065 = vadd.f32 0.0, %v1064
      %v1066 = vpop.f32.mrb[0].mxu0
      %v1067 = vpop.f32.mrb[0].mxu0
      %v1068 = vadd.f32 0.0, %v1067
      %v1069 = vpop.f32.mrb[0].mxu0
      %1070 = vmatprep.mubr.bf16.mxu0 0
      %1071 = vmatmul.mubr.bf16.gmra.mrb[0].mxu0 %v980
      %v1072 = vpop.f32.mrb[0].mxu0
      %v1073 = vadd.f32 0.0, %v1072
      %v1074 = vpop.f32.mrb[0].mxu0
      %v1075 = vpop.f32.mrb[0].mxu0
      %v1076 = vadd.f32 0.0, %v1075
      %v1077 = vpop.f32.mrb[0].mxu0
      %1078 = vdwg.mxu0
      %1079 = vrot.lane.b32.xlu0 %v663, 4
      %v1080 = vpop.permute.xlu0 %1079
      %1081 = vrot.lane.b32.xlu0 %v950, 8
      %v1082 = vpop.permute.xlu0 %1081
      %v1083 = vshrl.u32 %v950, 16
      %1085 = vrot.lane.b32.xlu0 %v1083, 12
      %v1086 = vpop.permute.xlu0 %1085
      %v1088 = vsel %vm442, %v413, %v1080
      %v1090 = vsel %vm459, %v1088, %v1082
      %v1092 = vsel %vm476, %v1090, %v1086
      %v1093 = vshrl.u32 %v970, 16
      %v1095 = vshll.u32 %v970, 16
      %v1097 = vrot.slane %v1095, 1
      %v1098 = vor.u32 %v1093, %v1097
      %v1099 = vshll.u32 %v1092, 16
      %v1101 = vrot.slane %v1099, 1
      %v1102 = vsel %vm277, %v1098, %v1101
      %s1103 = scalar_lea.vmem %s1, 24
      %v1104 = vld [vmem:[%s1103] sm:$0xf]
      %v1105 = vld [vmem:[%s1103 + $0x4] sm:$0xf]
      %v1108 = vunpack.c.l.b16 %v1104
      %v1109 = vunpack.c.l.b16 %v1105
      %v1110 = vpack.c.b16 %v1109, %v1108
      %v1113 = vsel %vm501, %v1102, 0
      %1115 = vmatprep.subr.bf16.mxu0 0
      %1116 = vmatpush1.bf16.msra.mxu0 %v1110
      %1117 = vmatprep.subr.bf16.mxu0 0
      %1118 = vmatpush1.bf16.msra.mxu0 0
      %1119 = vmatprep.subr.bf16.mxu0 0
      %1120 = vmatpush1.bf16.msra.mxu0 0
      %1121 = vmatprep.subr.bf16.mxu0 0
      %1122 = vmatpush1.bf16.msra.mxu0 0
      %1123 = vmatprep.subr.bf16.mxu0 0
      %1124 = vmatpush1.bf16.msra.mxu0 0
      %1125 = vmatprep.subr.bf16.mxu0 0
      %1126 = vmatpush1.bf16.msra.mxu0 0
      %1127 = vmatprep.subr.bf16.mxu0 0
      %1128 = vmatpush1.bf16.msra.mxu0 0
      %1129 = vmatprep.subr.bf16.mxu0 0
      %1130 = vmatpush1.bf16.msra.mxu0 0
      %1131 = vmatprep.subr.bf16.mxu0 0
      %1132 = vmatpush1.bf16.msra.mxu0 0
      %1133 = vmatprep.subr.bf16.mxu0 0
      %1134 = vmatpush1.bf16.msra.mxu0 0
      %1135 = vmatprep.subr.bf16.mxu0 0
      %1136 = vmatpush1.bf16.msra.mxu0 0
      %1137 = vmatprep.subr.bf16.mxu0 0
      %1138 = vmatpush1.bf16.msra.mxu0 0
      %1139 = vmatprep.subr.bf16.mxu0 0
      %1140 = vmatpush1.bf16.msra.mxu0 0
      %1141 = vmatprep.subr.bf16.mxu0 0
      %1142 = vmatpush1.bf16.msra.mxu0 0
      %1143 = vmatprep.subr.bf16.mxu0 0
      %1144 = vmatpush1.bf16.msra.mxu0 0
      %1145 = vmatprep.subr.bf16.mxu0 0
      %1146 = vmatpush1.bf16.msra.mxu0 0
      %1147 = vmatprep.mubr.bf16.mxu0 0
      %1148 = vmatmul.mubr.bf16.gmra.mrb[0].mxu0 %v822
      %v1149 = vpop.f32.mrb[0].mxu0
      %v1150 = vadd.f32 0.0, %v1149
      %v1151 = vpop.f32.mrb[0].mxu0
      %v1152 = vpop.f32.mrb[0].mxu0
      %v1153 = vadd.f32 0.0, %v1152
      %v1154 = vpop.f32.mrb[0].mxu0
      %1155 = vmatprep.mubr.bf16.mxu0 0
      %1156 = vmatmul.mubr.bf16.gmra.mrb[0].mxu0 %v825
      %v1157 = vpop.f32.mrb[0].mxu0
      %v1158 = vadd.f32 0.0, %v1157
      %v1159 = vpop.f32.mrb[0].mxu0
      %v1160 = vpop.f32.mrb[0].mxu0
      %v1161 = vadd.f32 0.0, %v1160
      %v1162 = vpop.f32.mrb[0].mxu0
      %1163 = vmatprep.mubr.bf16.mxu0 0
      %1164 = vmatmul.mubr.bf16.gmra.mrb[0].mxu0 %v828
      %v1165 = vpop.f32.mrb[0].mxu0
      %v1166 = vadd.f32 0.0, %v1165
      %v1167 = vpop.f32.mrb[0].mxu0
      %v1168 = vpop.f32.mrb[0].mxu0
      %v1169 = vadd.f32 0.0, %v1168
      %v1170 = vpop.f32.mrb[0].mxu0
      %1171 = vmatprep.mubr.bf16.mxu0 0
      %1172 = vmatmul.mubr.bf16.gmra.mrb[0].mxu0 %v831
      %v1173 = vpop.f32.mrb[0].mxu0
      %v1174 = vadd.f32 0.0, %v1173
      %v1175 = vpop.f32.mrb[0].mxu0
      %v1176 = vpop.f32.mrb[0].mxu0
      %v1177 = vadd.f32 0.0, %v1176
      %v1178 = vpop.f32.mrb[0].mxu0
      %1179 = vmatprep.mubr.bf16.mxu0 0
      %1180 = vmatmul.mubr.bf16.gmra.mrb[0].mxu0 %v834
      %v1181 = vpop.f32.mrb[0].mxu0
      %v1182 = vadd.f32 0.0, %v1181
      %v1183 = vpop.f32.mrb[0].mxu0
      %v1184 = vpop.f32.mrb[0].mxu0
      %v1185 = vadd.f32 0.0, %v1184
      %v1186 = vpop.f32.mrb[0].mxu0
      %1187 = vmatprep.mubr.bf16.mxu0 0
      %1188 = vmatmul.mubr.bf16.gmra.mrb[0].mxu0 %v837
      %v1189 = vpop.f32.mrb[0].mxu0
      %v1190 = vadd.f32 0.0, %v1189
      %v1191 = vpop.f32.mrb[0].mxu0
      %v1192 = vpop.f32.mrb[0].mxu0
      %v1193 = vadd.f32 0.0, %v1192
      %v1194 = vpop.f32.mrb[0].mxu0
      %1195 = vmatprep.mubr.bf16.mxu0 0
      %1196 = vmatmul.mubr.bf16.gmra.mrb[0].mxu0 %v840
      %v1197 = vpop.f32.mrb[0].mxu0
      %v1198 = vadd.f32 0.0, %v1197
      %v1199 = vpop.f32.mrb[0].mxu0
      %v1200 = vpop.f32.mrb[0].mxu0
      %v1201 = vadd.f32 0.0, %v1200
      %v1202 = vpop.f32.mrb[0].mxu0
      %1203 = vmatprep.mubr.bf16.mxu0 0
      %1204 = vmatmul.mubr.bf16.gmra.mrb[0].mxu0 %v1113
      %v1205 = vpop.f32.mrb[0].mxu0
      %v1206 = vadd.f32 0.0, %v1205
      %v1207 = vpop.f32.mrb[0].mxu0
      %v1208 = vpop.f32.mrb[0].mxu0
      %v1209 = vadd.f32 0.0, %v1208
      %v1210 = vpop.f32.mrb[0].mxu0
      %1211 = vdwg.mxu0
      %1228 = vrot.lane.b32.xlu0 %v877, 4
      %v1229 = vpop.permute.xlu0 %1228
      %1230 = vrot.lane.b32.xlu0 %v880, 4
      %v1231 = vpop.permute.xlu0 %1230
      %1232 = vrot.lane.b32.xlu0 %v885, 4
      %v1233 = vpop.permute.xlu0 %1232
      %1234 = vrot.lane.b32.xlu0 %v888, 4
      %v1235 = vpop.permute.xlu0 %1234
      %1236 = vrot.lane.b32.xlu0 %v893, 4
      %v1237 = vpop.permute.xlu0 %1236
      %1238 = vrot.lane.b32.xlu0 %v896, 4
      %v1239 = vpop.permute.xlu0 %1238
      %1240 = vrot.lane.b32.xlu0 %v901, 4
      %v1241 = vpop.permute.xlu0 %1240
      %1242 = vrot.lane.b32.xlu0 %v904, 4
      %v1243 = vpop.permute.xlu0 %1242
      %1244 = vrot.lane.b32.xlu0 %v909, 4
      %v1245 = vpop.permute.xlu0 %1244
      %1246 = vrot.lane.b32.xlu0 %v912, 4
      %v1247 = vpop.permute.xlu0 %1246
      %1248 = vrot.lane.b32.xlu0 %v917, 4
      %v1249 = vpop.permute.xlu0 %1248
      %1250 = vrot.lane.b32.xlu0 %v920, 4
      %v1251 = vpop.permute.xlu0 %1250
      %1252 = vrot.lane.b32.xlu0 %v925, 4
      %v1253 = vpop.permute.xlu0 %1252
      %1254 = vrot.lane.b32.xlu0 %v928, 4
      %v1255 = vpop.permute.xlu0 %1254
      %1256 = vrot.lane.b32.xlu0 %v933, 4
      %v1257 = vpop.permute.xlu0 %1256
      %1258 = vrot.lane.b32.xlu0 %v936, 4
      %v1259 = vpop.permute.xlu0 %1258
      %1292 = vrot.lane.b32.xlu0 %v1017, 8
      %v1293 = vpop.permute.xlu0 %1292
      %1294 = vrot.lane.b32.xlu0 %v1020, 8
      %v1295 = vpop.permute.xlu0 %1294
      %1296 = vrot.lane.b32.xlu0 %v1025, 8
      %v1297 = vpop.permute.xlu0 %1296
      %1298 = vrot.lane.b32.xlu0 %v1028, 8
      %v1299 = vpop.permute.xlu0 %1298
      %1300 = vrot.lane.b32.xlu0 %v1033, 8
      %v1301 = vpop.permute.xlu0 %1300
      %1302 = vrot.lane.b32.xlu0 %v1036, 8
      %v1303 = vpop.permute.xlu0 %1302
      %1304 = vrot.lane.b32.xlu0 %v1041, 8
      %v1305 = vpop.permute.xlu0 %1304
      %1306 = vrot.lane.b32.xlu0 %v1044, 8
      %v1307 = vpop.permute.xlu0 %1306
      %1308 = vrot.lane.b32.xlu0 %v1049, 8
      %v1309 = vpop.permute.xlu0 %1308
      %1310 = vrot.lane.b32.xlu0 %v1052, 8
      %v1311 = vpop.permute.xlu0 %1310
      %1312 = vrot.lane.b32.xlu0 %v1057, 8
      %v1313 = vpop.permute.xlu0 %1312
      %1314 = vrot.lane.b32.xlu0 %v1060, 8
      %v1315 = vpop.permute.xlu0 %1314
      %1316 = vrot.lane.b32.xlu0 %v1065, 8
      %v1317 = vpop.permute.xlu0 %1316
      %1318 = vrot.lane.b32.xlu0 %v1068, 8
      %v1319 = vpop.permute.xlu0 %1318
      %1320 = vrot.lane.b32.xlu0 %v1073, 8
      %v1321 = vpop.permute.xlu0 %1320
      %1322 = vrot.lane.b32.xlu0 %v1076, 8
      %v1323 = vpop.permute.xlu0 %1322
      %1356 = vrot.lane.b32.xlu0 %v1150, 12
      %v1357 = vpop.permute.xlu0 %1356
      %1358 = vrot.lane.b32.xlu0 %v1153, 12
      %v1359 = vpop.permute.xlu0 %1358
      %1360 = vrot.lane.b32.xlu0 %v1158, 12
      %v1361 = vpop.permute.xlu0 %1360
      %1362 = vrot.lane.b32.xlu0 %v1161, 12
      %v1363 = vpop.permute.xlu0 %1362
      %1364 = vrot.lane.b32.xlu0 %v1166, 12
      %v1365 = vpop.permute.xlu0 %1364
      %1366 = vrot.lane.b32.xlu0 %v1169, 12
      %v1367 = vpop.permute.xlu0 %1366
      %1368 = vrot.lane.b32.xlu0 %v1174, 12
      %v1369 = vpop.permute.xlu0 %1368
      %1370 = vrot.lane.b32.xlu0 %v1177, 12
      %v1371 = vpop.permute.xlu0 %1370
      %1372 = vrot.lane.b32.xlu0 %v1182, 12
      %v1373 = vpop.permute.xlu0 %1372
      %1374 = vrot.lane.b32.xlu0 %v1185, 12
      %v1375 = vpop.permute.xlu0 %1374
      %1376 = vrot.lane.b32.xlu0 %v1190, 12
      %v1377 = vpop.permute.xlu0 %1376
      %1378 = vrot.lane.b32.xlu0 %v1193, 12
      %v1379 = vpop.permute.xlu0 %1378
      %1380 = vrot.lane.b32.xlu0 %v1198, 12
      %v1381 = vpop.permute.xlu0 %1380
      %1382 = vrot.lane.b32.xlu0 %v1201, 12
      %v1383 = vpop.permute.xlu0 %1382
      %1384 = vrot.lane.b32.xlu0 %v1206, 12
      %v1385 = vpop.permute.xlu0 %1384
      %1386 = vrot.lane.b32.xlu0 %v1209, 12
      %v1387 = vpop.permute.xlu0 %1386
      %v1404 = vsel %vm442, %v553, %v1229
      %v1405 = vsel %vm442, %v556, %v1231
      %v1406 = vsel %vm442, %v561, %v1233
      %v1407 = vsel %vm442, %v564, %v1235
      %v1408 = vsel %vm442, %v569, %v1237
      %v1409 = vsel %vm442, %v572, %v1239
      %v1410 = vsel %vm442, %v577, %v1241
      %v1411 = vsel %vm442, %v580, %v1243
      %v1412 = vsel %vm442, %v585, %v1245
      %v1413 = vsel %vm442, %v588, %v1247
      %v1414 = vsel %vm442, %v593, %v1249
      %v1415 = vsel %vm442, %v596, %v1251
      %v1416 = vsel %vm442, %v601, %v1253
      %v1417 = vsel %vm442, %v604, %v1255
      %v1418 = vsel %vm442, %v609, %v1257
      %v1419 = vsel %vm442, %v612, %v1259
      %v1420 = vsel %vm459, %v1404, %v1293
      %v1421 = vsel %vm459, %v1405, %v1295
      %v1422 = vsel %vm459, %v1406, %v1297
      %v1423 = vsel %vm459, %v1407, %v1299
      %v1424 = vsel %vm459, %v1408, %v1301
      %v1425 = vsel %vm459, %v1409, %v1303
      %v1426 = vsel %vm459, %v1410, %v1305
      %v1427 = vsel %vm459, %v1411, %v1307
      %v1428 = vsel %vm459, %v1412, %v1309
      %v1429 = vsel %vm459, %v1413, %v1311
      %v1430 = vsel %vm459, %v1414, %v1313
      %v1431 = vsel %vm459, %v1415, %v1315
      %v1432 = vsel %vm459, %v1416, %v1317
      %v1433 = vsel %vm459, %v1417, %v1319
      %v1434 = vsel %vm459, %v1418, %v1321
      %v1435 = vsel %vm459, %v1419, %v1323
      %v1436 = vsel %vm476, %v1420, %v1357
      %v1437 = vsel %vm476, %v1421, %v1359
      %v1438 = vsel %vm476, %v1422, %v1361
      %v1439 = vsel %vm476, %v1423, %v1363
      %v1440 = vsel %vm476, %v1424, %v1365
      %v1441 = vsel %vm476, %v1425, %v1367
      %v1442 = vsel %vm476, %v1426, %v1369
      %v1443 = vsel %vm476, %v1427, %v1371
      %v1444 = vsel %vm476, %v1428, %v1373
      %v1445 = vsel %vm476, %v1429, %v1375
      %v1446 = vsel %vm476, %v1430, %v1377
      %v1447 = vsel %vm476, %v1431, %v1379
      %v1448 = vsel %vm476, %v1432, %v1381
      %v1449 = vsel %vm476, %v1433, %v1383
      %v1450 = vsel %vm476, %v1434, %v1385
      %v1451 = vsel %vm476, %v1435, %v1387
      %1452 = vst.msk [vmem:[%s177] sm:$0xff] %vm501, %v1436
      %1453 = vst.msk [vmem:[%s177 + $0x8] sm:$0xff] %vm501, %v1437
      %1454 = vst.msk [vmem:[%s177 + $0x10] sm:$0xff] %vm501, %v1438
      %1455 = vst.msk [vmem:[%s177 + $0x18] sm:$0xff] %vm501, %v1439
      %1456 = vst.msk [vmem:[%s177 + $0x20] sm:$0xff] %vm501, %v1440
      %1457 = vst.msk [vmem:[%s177 + $0x28] sm:$0xff] %vm501, %v1441
      %1458 = vst.msk [vmem:[%s177 + $0x30] sm:$0xff] %vm501, %v1442
      %1459 = vst.msk [vmem:[%s177 + $0x38] sm:$0xff] %vm501, %v1443
      %1460 = vst.msk [vmem:[%s177 + $0x40] sm:$0xff] %vm501, %v1444
      %1461 = vst.msk [vmem:[%s177 + $0x48] sm:$0xff] %vm501, %v1445
      %1462 = vst.msk [vmem:[%s177 + $0x50] sm:$0xff] %vm501, %v1446
      %1463 = vst.msk [vmem:[%s177 + $0x58] sm:$0xff] %vm501, %v1447
      %1464 = vst.msk [vmem:[%s177 + $0x60] sm:$0xff] %vm501, %v1448
      %1465 = vst.msk [vmem:[%s177 + $0x68] sm:$0xff] %vm501, %v1449
      %1466 = vst.msk [vmem:[%s177 + $0x70] sm:$0xff] %vm501, %v1450
      %1467 = vst.msk [vmem:[%s177 + $0x78] sm:$0xff] %vm501, %v1451
      %v1468 = vsel %vm501, %v1436, 0.0
      %v1469 = vsel %vm501, %v1437, 0.0
      %v1470 = vadd.f32 %v1468, %v1469
      %v1471 = vsel %vm501, %v1438, 0.0
      %v1472 = vadd.f32 %v1470, %v1471
      %v1473 = vsel %vm501, %v1439, 0.0
      %v1474 = vadd.f32 %v1472, %v1473
      %v1475 = vsel %vm501, %v1440, 0.0
      %v1476 = vadd.f32 %v1474, %v1475
      %v1477 = vsel %vm501, %v1441, 0.0
      %v1478 = vadd.f32 %v1476, %v1477
      %v1479 = vsel %vm501, %v1442, 0.0
      %v1480 = vadd.f32 %v1478, %v1479
      %v1481 = vsel %vm501, %v1443, 0.0
      %v1482 = vadd.f32 %v1480, %v1481
      %v1483 = vsel %vm501, %v1444, 0.0
      %v1484 = vadd.f32 %v1482, %v1483
      %v1485 = vsel %vm501, %v1445, 0.0
      %v1486 = vadd.f32 %v1484, %v1485
      %v1487 = vsel %vm501, %v1446, 0.0
      %v1488 = vadd.f32 %v1486, %v1487
      %v1489 = vsel %vm501, %v1447, 0.0
      %v1490 = vadd.f32 %v1488, %v1489
      %v1491 = vsel %vm501, %v1448, 0.0
      %v1492 = vadd.f32 %v1490, %v1491
      %v1493 = vsel %vm501, %v1449, 0.0
      %v1494 = vadd.f32 %v1492, %v1493
      %v1495 = vsel %vm501, %v1450, 0.0
      %v1496 = vadd.f32 %v1494, %v1495
      %v1497 = vsel %vm501, %v1451, 0.0
      %v1498 = vadd.f32 %v1496, %v1497
      %v1499 = vrot.slane %v1498, 4
      %v1500 = vadd.f32 %v1498, %v1499
      %v1501 = vrot.slane %v1500, 2
      %v1502 = vadd.f32 %v1500, %v1501
      %v1503 = vrot.slane %v1502, 1
      %v1504 = vadd.f32 %v1502, %v1503
      %v1505 = vmul.f32 %v1436, %v1436
      %v1506 = vmul.f32 %v1437, %v1437
      %v1507 = vmul.f32 %v1438, %v1438
      %v1508 = vmul.f32 %v1439, %v1439
      %v1509 = vmul.f32 %v1440, %v1440
      %v1510 = vmul.f32 %v1441, %v1441
      %v1511 = vmul.f32 %v1442, %v1442
      %v1512 = vmul.f32 %v1443, %v1443
      %v1513 = vmul.f32 %v1444, %v1444
      %v1514 = vmul.f32 %v1445, %v1445
      %v1515 = vmul.f32 %v1446, %v1446
      %v1516 = vmul.f32 %v1447, %v1447
      %v1517 = vmul.f32 %v1448, %v1448
      %v1518 = vmul.f32 %v1449, %v1449
      %v1519 = vmul.f32 %v1450, %v1450
      %v1520 = vmul.f32 %v1451, %v1451
      %v1521 = vsel %vm501, %v1505, 0.0
      %v1522 = vsel %vm501, %v1506, 0.0
      %v1523 = vadd.f32 %v1521, %v1522
      %v1524 = vsel %vm501, %v1507, 0.0
      %v1525 = vadd.f32 %v1523, %v1524
      %v1526 = vsel %vm501, %v1508, 0.0
      %v1527 = vadd.f32 %v1525, %v1526
      %v1528 = vsel %vm501, %v1509, 0.0
      %v1529 = vadd.f32 %v1527, %v1528
      %v1530 = vsel %vm501, %v1510, 0.0
      %v1531 = vadd.f32 %v1529, %v1530
      %v1532 = vsel %vm501, %v1511, 0.0
      %v1533 = vadd.f32 %v1531, %v1532
      %v1534 = vsel %vm501, %v1512, 0.0
      %v1535 = vadd.f32 %v1533, %v1534
      %v1536 = vsel %vm501, %v1513, 0.0
      %v1537 = vadd.f32 %v1535, %v1536
      %v1538 = vsel %vm501, %v1514, 0.0
      %v1539 = vadd.f32 %v1537, %v1538
      %v1540 = vsel %vm501, %v1515, 0.0
      %v1541 = vadd.f32 %v1539, %v1540
      %v1542 = vsel %vm501, %v1516, 0.0
      %v1543 = vadd.f32 %v1541, %v1542
      %v1544 = vsel %vm501, %v1517, 0.0
      %v1545 = vadd.f32 %v1543, %v1544
      %v1546 = vsel %vm501, %v1518, 0.0
      %v1547 = vadd.f32 %v1545, %v1546
      %v1548 = vsel %vm501, %v1519, 0.0
      %v1549 = vadd.f32 %v1547, %v1548
      %v1550 = vsel %vm501, %v1520, 0.0
      %v1551 = vadd.f32 %v1549, %v1550
      %v1552 = vrot.slane %v1551, 4
      %v1553 = vadd.f32 %v1551, %v1552
      %v1554 = vrot.slane %v1553, 2
      %v1555 = vadd.f32 %v1553, %v1554
      %v1556 = vrot.slane %v1555, 1
      %v1557 = vadd.f32 %v1555, %v1556
      %vm1558 = vcmask 1040384
      %v1559 = vsel %vm1558, %v1504, %v1557
      %vm1560 = vcmask 123904
      %1561 = vst.msk [vmem:[%s181] sm:$0x3] %vm1560, %v1559
      %p1562 = scmp.lt.s32.totalorder %s15, 3
      %s1563 = scalar_select %p1562, %s15, 3
      %s1564 = smul.addr %s1563, 16
      %s1565 = smul.addr %s1564, 8
      %s1566 = scalar_lea.vmem %s2, %s1565
      %p1567 = scmp.lt.s32.totalorder %s15, 3
      %s1568 = scalar_select %p1567, %s15, 3
      %s1569 = smul.addr %s1568, 2
      %s1570 = scalar_lea.vmem %s3, %s1569
      // Predicated region
      $region29: #{unet_up.1} parent=27 // pred_check
        %p1571 = pneg %p80
      $region30: #{unet_up.1} parent=27 // pred_check_branch
        %1573 = sbr.rel (%p1571) target = $region32
      $region31: #{unet_up.1} parent=27 // pred_region
        _
      $region32: #{unet_up.1} parent=27 // pred_fallthru
        _
      // Predicated region
      $region33: #{unet_up.1} parent=27 // pred_check
        %p1574 = pneg %p106
      $region34: #{unet_up.1} parent=27 // pred_check_branch
        %1576 = sbr.rel (%p1574) target = $region36
      $region35: #{unet_up.1} parent=27 // pred_region
        _
      $region36: #{unet_up.1} parent=27 // pred_fallthru
        _
    $region28: #{unet_up.1} parent=5 // pred_fallthru
      _
    %p1577 = scmp.le.s32.totalorder 2, %s10
    // Predicated region
    $region37: #{unet_up.1} parent=5 // pred_check
      %p1578 = pneg %p1577
    $region38: #{unet_up.1} parent=5 // pred_check_branch
      %1580 = sbr.rel (%p1578) target = $region40
    $region39: #{unet_up.1} parent=5 // pred_region
      %s1581 = ssub.s32 %s10, 2
      // Predicated region
      $region41: #{unet_up.1} parent=39 // pred_check
        %p1582 = pneg %p86
      $region42: #{unet_up.1} parent=39 // pred_check_branch
        %1584 = sbr.rel (%p1582) target = $region44
      $region43: #{unet_up.1} parent=39 // pred_region
        %p1585 = scmp.lt.s32.totalorder %s16, 3
        %s1586 = scalar_select %p1585, %s16, 3
        %s1587 = smul.addr %s1586, 16
        %s1588 = smul.addr %s1587, 8
        %s1589 = scalar_lea.vmem %s2, %s1588
      $region44: #{unet_up.1} parent=39 // pred_fallthru
        _
      // Predicated region
      $region45: #{unet_up.1} parent=39 // pred_check
        %p1590 = pneg %p112
      $region46: #{unet_up.1} parent=39 // pred_check_branch
        %1592 = sbr.rel (%p1590) target = $region48
      $region47: #{unet_up.1} parent=39 // pred_region
        %p1593 = scmp.lt.s32.totalorder %s16, 3
        %s1594 = scalar_select %p1593, %s16, 3
        %s1595 = smul.addr %s1594, 2
        %s1596 = scalar_lea.vmem %s3, %s1595
      $region48: #{unet_up.1} parent=39 // pred_fallthru
        _
    $region40: #{unet_up.1} parent=5 // pred_fallthru
      _
  $region6: #{unet_up.1} parent=0 // loop_footer
    %s14 = sadd.s32 1, %s10
  $region7: #{unet_up.1} parent=0 // loop_footer_branch
    %9 = sbr.rel target = $region3
  $region8: #{unet_up.1} parent=0 // loop_exit
    _

</llo_original>
